<compile_context>
chip_gen: v6e
topology: v6e:2x2x1
jax: 0.10.0
libtpu: 0.0.40
codegen_flags: <defaults>
</compile_context>

<pallas_src>
import jax
import jax.numpy as jnp
from jax.experimental import pallas as pl
from jax.experimental.pallas import tpu as pltpu

_MIB = 1024 * 1024


def logz_kernel(h_ref, mask_ref, denom_ref, w_pool_ref, b_pool_ref, w_cls_ref,
                b_cls_ref, out_ref, acc_ref):
    s = pl.program_id(1)

    @pl.when(s == 0)
    def _init():
        acc_ref[...] = jnp.zeros_like(acc_ref)

    h = h_ref[...]                      # (tb, ts, H)  native dtype
    m = mask_ref[...]                   # (tb, ts)     0/1 mask, same dtype

    # Masked sequence sum routed through the MXU:
    #   (tb, 1, ts) @ (tb, ts, H) -> (tb, 1, H), accumulated in f32.
    acc_ref[...] += jnp.einsum('bks,bsh->bkh', m[:, None, :], h,
                               preferred_element_type=jnp.float32)[:, 0, :]

    @pl.when(s == pl.num_programs(1) - 1)
    def _finalize():
        # NOTE: behavioral difference vs. PyTorch: the original divides by
        # attention_mask.sum() directly and would emit NaN/Inf for a fully
        # padded row; we clamp the denominator instead.
        denom = jnp.maximum(denom_ref[...], 1e-6)             # (tb, 1)
        pooled_in = acc_ref[...] * pl.reciprocal(denom)       # exact 1/x
        # pooler: Tanh(Linear(H -> H))
        pooled = jnp.tanh(
            jnp.dot(pooled_in, w_pool_ref[...],
                    preferred_element_type=jnp.float32) + b_pool_ref[...])
        # dropout: identity at inference
        # classifier Linear(H -> 1) as a lane reduction (N=1 wastes the MXU)
        logits = (jnp.sum(pooled * w_cls_ref[...], axis=-1, keepdims=True)
                  + b_cls_ref[0])
        out_ref[...] = logits.astype(out_ref.dtype)           # (tb, 1)


def _tpu_vmem_capacity():
    """Physical VMEM bytes per TensorCore; conservative fallback if unknown."""
    try:
        return int(pltpu.get_tpu_info().vmem_capacity_bytes)
    except Exception:
        return 64 * _MIB   # assume the smallest (v7x-like) so we never OOM


def _vmem_budgets(weight_bytes):
    """(vmem_limit_bytes, per-buffer streaming budget) for this generation."""
    cap = _tpu_vmem_capacity()
    if cap >= 128 * _MIB:                       # v5e / v6e: 128 MiB VMEM
        vmem_limit = 64 * _MIB
        stream_cap = 14 * _MIB
        small_vmem = False
    else:                                        # v7x-class: 64 MiB per TC
        vmem_limit = min(48 * _MIB, (cap * 3) // 4)
        stream_cap = 7 * _MIB
        small_vmem = True
    # Hidden block is double-buffered; leave room for (double-buffered)
    # weights, the mask block, the accumulator and misc scratch.
    stream_budget = max(2 * _MIB,
                        min(stream_cap,
                            (vmem_limit - 2 * weight_bytes - 2 * _MIB) // 3))
    return vmem_limit, stream_budget, small_vmem


def _pick_batch_tile(B, min_batch_steps):
    # Output / mask / denom blocks need the batch dim divisible by 8 or == B.
    # Prefer 16 (natively packed sublane tile), but honor min_batch_steps so
    # 2-TC chips get >=2 "parallel" grid steps.
    for tb in (16, 8):
        if B % tb == 0 and B // tb >= min_batch_steps:
            return tb
    for tb in (16, 8):
        if B % tb == 0:
            return tb
    return B


def _pick_seq_tile(S, tb, H, itemsize, budget_bytes):
    # Mask/hidden blocks' seq dim must be a multiple of 128 or the full S.
    if S % 128 != 0:
        return S
    per_128 = tb * 128 * H * itemsize
    max_ts = max(128, (budget_bytes // per_128) * 128)
    ts = min(S, max_ts)
    while S % ts != 0:
        ts -= 128
    return ts


def logz_forward(last_hidden_state, attention_mask, w_pool, b_pool, w_cls,
                 b_cls, *, seq_tile=None):
    B, S, H = last_hidden_state.shape
    h = last_hidden_state                     # stream in its NATIVE dtype
    itemsize = jnp.dtype(h.dtype).itemsize
    m = attention_mask.astype(h.dtype)        # 0/1 mask -> exact in any float

    # Sequence lengths computed once here (removes a per-step XLU reduce).
    denom = attention_mask.astype(jnp.float32).sum(-1, keepdims=True)  # (B,1)

    w_pool = w_pool.astype(jnp.float32)               # (H, H)   (in, out)
    b_pool = b_pool.reshape(1, H).astype(jnp.float32)
    w_cls_row = w_cls.reshape(1, H).astype(jnp.float32)
    b_cls = b_cls.reshape(1).astype(jnp.float32)

    weight_bytes = (H * H + 2 * H) * 4
    vmem_limit, stream_budget, small_vmem = _vmem_budgets(weight_bytes)

    tb = _pick_batch_tile(B, min_batch_steps=2 if small_vmem else 1)

    # If S is not a 128-multiple and a full-S block would not fit the budget,
    # pad S up to a 128-multiple (masked tail contributes exactly zero).
    if S % 128 != 0 and tb * S * H * itemsize > stream_budget:
        s_pad = pl.cdiv(S, 128) * 128
        h = jnp.pad(h, ((0, 0), (0, s_pad - S), (0, 0)))
        m = jnp.pad(m, ((0, 0), (0, s_pad - S)))
        S = s_pad

    ts = (seq_tile if seq_tile is not None
          else _pick_seq_tile(S, tb, H, itemsize, stream_budget))
    assert B % tb == 0 and S % ts == 0, (B, tb, S, ts)
    assert ts == S or ts % 128 == 0, ts

    grid = (B // tb, S // ts)   # reduction (seq) axis last

    cost = pl.CostEstimate(
        flops=2 * B * S * H + 2 * B * H * H + 2 * B * H,
        transcendentals=B * H,
        bytes_accessed=(B * S * H * itemsize + B * S * itemsize
                        + (H * H + 2 * H + 1) * 4 + 2 * B * 4),
    )

    return pl.pallas_call(
        logz_kernel,
        out_shape=jax.ShapeDtypeStruct((B, 1), jnp.float32),
        grid=grid,
        in_specs=[
            pl.BlockSpec((tb, ts, H), lambda b, s: (b, s, 0)),   # hidden state
            pl.BlockSpec((tb, ts), lambda b, s: (b, s)),         # mask
            pl.BlockSpec((tb, 1), lambda b, s: (b, 0)),          # seq lengths
            pl.BlockSpec((H, H), lambda b, s: (0, 0)),           # pooler W
            pl.BlockSpec((1, H), lambda b, s: (0, 0)),           # pooler b
            pl.BlockSpec((1, H), lambda b, s: (0, 0)),           # classifier W
            pl.BlockSpec(memory_space=pltpu.MemorySpace.SMEM),   # classifier b
        ],
        out_specs=pl.BlockSpec((tb, 1), lambda b, s: (b, 0)),
        scratch_shapes=[
            pltpu.VMEM((tb, H), jnp.float32),   # masked-sum accumulator
        ],
        compiler_params=pltpu.CompilerParams(
            dimension_semantics=("parallel", "arbitrary"),
            vmem_limit_bytes=vmem_limit,
        ),
        cost_estimate=cost,
    )(h, m, denom, w_pool, b_pool, w_cls_row, b_cls)


if __name__ == "__main__":
    # Small, deterministic synthetic setup (multi-tile sequence to exercise
    # the accumulate/finalize path).
    B, S, H, VOCAB = 2, 256, 32, 64

    key = jax.random.PRNGKey(0)
    k_emb, k_ids, k_wp, k_bp, k_wc, k_bc = jax.random.split(key, 6)

    # Stand-in for the pretrained T5 encoder: deterministic token embedding.
    # TODO(synk): replace with a real T5 encoder forward if ever needed.
    embedding_table = jax.random.normal(k_emb, (VOCAB, H), dtype=jnp.float32)
    input_ids = jax.random.randint(k_ids, (B, S), 0, VOCAB)
    last_hidden_state = embedding_table[input_ids]        # (B, S, H), JAX glue

    # Non-trivial attention mask (second sequence is padded after 150 tokens).
    positions = jnp.arange(S)[None, :]
    lengths = jnp.array([[S], [150]])
    attention_mask = (positions < lengths).astype(jnp.float32)      # (B, S)

    # Pooler Linear(H, H) and classifier Linear(H, 1), stored as (in, out).
    w_pool = jax.random.normal(k_wp, (H, H), dtype=jnp.float32) * 0.05
    b_pool = jax.random.normal(k_bp, (H,), dtype=jnp.float32) * 0.05
    w_cls = jax.random.normal(k_wc, (H, 1), dtype=jnp.float32) * 0.05
    b_cls = jax.random.normal(k_bc, (1,), dtype=jnp.float32) * 0.05

    # seq_tile=128 -> 2 sequence steps: exercises accumulation across the grid.
    logits = logz_forward(last_hidden_state, attention_mask,
                          w_pool, b_pool, w_cls, b_cls, seq_tile=128)
    logits = jax.block_until_ready(logits)

    # Pure-JAX f32 reference (kernel now streams the hidden state in f32 too).
    pooled_in_ref = (last_hidden_state * attention_mask[:, :, None]).sum(1) \
        / attention_mask.sum(-1, keepdims=True)
    pooled_ref = jnp.tanh(pooled_in_ref @ w_pool + b_pool)
    logits_ref = pooled_ref @ w_cls + b_cls

    assert logits.shape == (B, 1), logits.shape
    assert jnp.allclose(logits, logits_ref, atol=1e-4, rtol=1e-4), (
        logits, logits_ref)

    print("KERNEL_OK")
</pallas_src>

<mosaic_0001>
module attributes {stable_mosaic.version = 11 : i64} {
  func.func @logz_kernel(%arg0: i32, %arg1: i32, %arg2: memref<2x128x32xf32, #tpu.memory_space<vmem>>, %arg3: memref<2x128xf32, #tpu.memory_space<vmem>>, %arg4: memref<2x1xf32, #tpu.memory_space<vmem>>, %arg5: memref<32x32xf32, #tpu.memory_space<vmem>>, %arg6: memref<1x32xf32, #tpu.memory_space<vmem>>, %arg7: memref<1x32xf32, #tpu.memory_space<vmem>>, %arg8: memref<1xf32, #tpu.memory_space<smem>>, %arg9: memref<2x1xf32, #tpu.memory_space<vmem>>, %arg10: memref<2x32xf32, #tpu.memory_space<vmem>>) attributes {dimension_semantics = [#tpu.dimension_semantics<parallel>, #tpu.dimension_semantics<arbitrary>], iteration_bounds = array<i64: 1, 2>, scalar_prefetch = 0 : i64, scratch_operands = 1 : i64, tpu.core_type = #tpu.core_type<tc>, window_params = [{transform_indices = @transform_0, window_bounds = array<i64: 2, 128, 32>}, {transform_indices = @transform_1, window_bounds = array<i64: 2, 128>}, {transform_indices = @transform_2, window_bounds = array<i64: 2, 1>}, {pipeline_mode = #tpu.pipeline_mode<synchronous>, transform_indices = @transform_3, window_bounds = array<i64: 32, 32>}, {pipeline_mode = #tpu.pipeline_mode<synchronous>, transform_indices = @transform_4, window_bounds = array<i64: 1, 32>}, {pipeline_mode = #tpu.pipeline_mode<synchronous>, transform_indices = @transform_5, window_bounds = array<i64: 1, 32>}, {transform_indices = @transform_6, window_bounds = array<i64: 1>}, {transform_indices = @transform_7, window_bounds = array<i64: 2, 1>}]} {
    %c0_i32 = arith.constant 0 : i32
    %0 = arith.cmpi eq, %arg1, %c0_i32 : i32
    %1 = arith.extui %0 : i1 to i32
    %c0_i32_0 = arith.constant 0 : i32
    %2 = arith.cmpi ne, %1, %c0_i32_0 : i32
    scf.if %2 {
      %cst_10 = arith.constant 0.000000e+00 : f32
      %14 = vector.broadcast %cst_10 : f32 to vector<2x32xf32>
      %c0_11 = arith.constant 0 : index
      %c0_12 = arith.constant 0 : index
      %15 = vector.load %arg10[%c0_11, %c0_12] : memref<2x32xf32, #tpu.memory_space<vmem>>, vector<2x32xf32>
      tpu.vector_store %arg10[%c0_11, %c0_12], %14 {strides = array<i32>} : memref<2x32xf32, #tpu.memory_space<vmem>>, vector<2x32xf32>,
    } else {
    }
    %c0 = arith.constant 0 : index
    %c0_1 = arith.constant 0 : index
    %c0_2 = arith.constant 0 : index
    %3 = vector.load %arg2[%c0, %c0_1, %c0_2] : memref<2x128x32xf32, #tpu.memory_space<vmem>>, vector<2x128x32xf32>
    %c0_3 = arith.constant 0 : index
    %c0_4 = arith.constant 0 : index
    %4 = vector.load %arg3[%c0_3, %c0_4] : memref<2x128xf32, #tpu.memory_space<vmem>>, vector<2x128xf32>
    %c0_5 = arith.constant 0 : index
    %c0_6 = arith.constant 0 : index
    %5 = vector.load %arg10[%c0_5, %c0_6] : memref<2x32xf32, #tpu.memory_space<vmem>>, vector<2x32xf32>
    %6 = vector.shape_cast %4 : vector<2x128xf32> to vector<2x1x128xf32>
    "tpu.trace_start"() <{level = 10 : i32, message = "bks,bsh->bkh"}> : () -> ()
    %cst = arith.constant dense<0.000000e+00> : vector<2x1x32xf32>
    %7 = tpu.matmul %6, %3, %cst {dimension_numbers = #tpu.dot_dimension_numbers<[2], [1], [1], [2], [0, 0, 0, 1, 1, 2], [0], [0]>} : vector<2x1x128xf32>, vector<2x128x32xf32>, vector<2x1x32xf32> -> vector<2x1x32xf32>
    "tpu.trace_stop"() : () -> ()
    %8 = vector.shape_cast %7 : vector<2x1x32xf32> to vector<2x32xf32>
    %9 = arith.addf %5, %8 : vector<2x32xf32>
    %c0_7 = arith.constant 0 : index
    %c0_8 = arith.constant 0 : index
    %10 = vector.load %arg10[%c0_7, %c0_8] : memref<2x32xf32, #tpu.memory_space<vmem>>, vector<2x32xf32>
    tpu.vector_store %arg10[%c0_7, %c0_8], %9 {strides = array<i32>} : memref<2x32xf32, #tpu.memory_space<vmem>>, vector<2x32xf32>,
    %c1_i32 = arith.constant 1 : i32
    %11 = arith.cmpi eq, %arg1, %c1_i32 : i32
    %12 = arith.extui %11 : i1 to i32
    %c0_i32_9 = arith.constant 0 : i32
    %13 = arith.cmpi ne, %12, %c0_i32_9 : i32
    scf.if %13 {
      %c0_10 = arith.constant 0 : index
      %c0_11 = arith.constant 0 : index
      %14 = vector.load %arg4[%c0_10, %c0_11] : memref<2x1xf32, #tpu.memory_space<vmem>>, vector<2x1xf32>
      %cst_12 = arith.constant 9.99999997E-7 : f32
      %15 = vector.broadcast %cst_12 : f32 to vector<2x1xf32>
      %16 = arith.maximumf %14, %15 : vector<2x1xf32>
      %c0_13 = arith.constant 0 : index
      %c0_14 = arith.constant 0 : index
      %17 = vector.load %arg10[%c0_13, %c0_14] : memref<2x32xf32, #tpu.memory_space<vmem>>, vector<2x32xf32>
      %18 = tpu.reciprocal %16 : vector<2x1xf32> -> vector<2x1xf32>
      %19 = vector.broadcast %18 : vector<2x1xf32> to vector<2x32xf32>
      %20 = arith.mulf %17, %19 : vector<2x32xf32>
      %c0_15 = arith.constant 0 : index
      %c0_16 = arith.constant 0 : index
      %21 = vector.load %arg5[%c0_15, %c0_16] : memref<32x32xf32, #tpu.memory_space<vmem>>, vector<32x32xf32>
      %cst_17 = arith.constant dense<0.000000e+00> : vector<2x32xf32>
      %22 = tpu.matmul %20, %21, %cst_17 {dimension_numbers = #tpu.dot_dimension_numbers<[1], [0], [0], [1], [0, 0, 1, 1], [], []>} : vector<2x32xf32>, vector<32x32xf32>, vector<2x32xf32> -> vector<2x32xf32>
      %c0_18 = arith.constant 0 : index
      %c0_19 = arith.constant 0 : index
      %23 = vector.load %arg6[%c0_18, %c0_19] : memref<1x32xf32, #tpu.memory_space<vmem>>, vector<1x32xf32>
      %24 = vector.broadcast %23 : vector<1x32xf32> to vector<2x32xf32>
      %25 = arith.addf %22, %24 : vector<2x32xf32>
      %26 = math.tanh %25 : vector<2x32xf32>
      %c0_20 = arith.constant 0 : index
      %c0_21 = arith.constant 0 : index
      %27 = vector.load %arg7[%c0_20, %c0_21] : memref<1x32xf32, #tpu.memory_space<vmem>>, vector<1x32xf32>
      %28 = vector.broadcast %27 : vector<1x32xf32> to vector<2x32xf32>
      %29 = arith.mulf %26, %28 : vector<2x32xf32>
      %cst_22 = arith.constant dense<0.000000e+00> : vector<2xf32>
      %30 = vector.multi_reduction <add>, %29, %cst_22 [1] : vector<2x32xf32> to vector<2xf32>
      %31 = vector.shape_cast %30 : vector<2xf32> to vector<2x1xf32>
      %c0_23 = arith.constant 0 : index
      %32 = memref.load %arg8[%c0_23] : memref<1xf32, #tpu.memory_space<smem>>
      %33 = vector.broadcast %32 : f32 to vector<2x1xf32>
      %34 = arith.addf %31, %33 : vector<2x1xf32>
      %c0_24 = arith.constant 0 : index
      %c0_25 = arith.constant 0 : index
      %35 = vector.load %arg9[%c0_24, %c0_25] : memref<2x1xf32, #tpu.memory_space<vmem>>, vector<2x1xf32>
      tpu.vector_store %arg9[%c0_24, %c0_25], %34 {strides = array<i32>} : memref<2x1xf32, #tpu.memory_space<vmem>>, vector<2x1xf32>,
    } else {
    }
    return
  }
  func.func @transform_0(%arg0: i32, %arg1: i32) -> (i32, i32, i32) {
    %c0_i32 = arith.constant 0 : i32
    %c0_i32_0 = arith.constant 0 : i32
    return %arg0, %arg1, %c0_i32 : i32, i32, i32
  }
  func.func @transform_1(%arg0: i32, %arg1: i32) -> (i32, i32) {
    %c0_i32 = arith.constant 0 : i32
    return %arg0, %arg1 : i32, i32
  }
  func.func @transform_2(%arg0: i32, %arg1: i32) -> (i32, i32) {
    %c0_i32 = arith.constant 0 : i32
    %c0_i32_0 = arith.constant 0 : i32
    return %arg0, %c0_i32 : i32, i32
  }
  func.func @transform_3(%arg0: i32, %arg1: i32) -> (i32, i32) {
    %c0_i32 = arith.constant 0 : i32
    %c0_i32_0 = arith.constant 0 : i32
    %c0_i32_1 = arith.constant 0 : i32
    return %c0_i32, %c0_i32_0 : i32, i32
  }
  func.func @transform_4(%arg0: i32, %arg1: i32) -> (i32, i32) {
    %c0_i32 = arith.constant 0 : i32
    %c0_i32_0 = arith.constant 0 : i32
    %c0_i32_1 = arith.constant 0 : i32
    return %c0_i32, %c0_i32_0 : i32, i32
  }
  func.func @transform_5(%arg0: i32, %arg1: i32) -> (i32, i32) {
    %c0_i32 = arith.constant 0 : i32
    %c0_i32_0 = arith.constant 0 : i32
    %c0_i32_1 = arith.constant 0 : i32
    return %c0_i32, %c0_i32_0 : i32, i32
  }
  func.func @transform_6(%arg0: i32, %arg1: i32) -> i32 {
    %c0_i32 = arith.constant 0 : i32
    %c0_i32_0 = arith.constant 0 : i32
    return %c0_i32 : i32
  }
  func.func @transform_7(%arg0: i32, %arg1: i32) -> (i32, i32) {
    %c0_i32 = arith.constant 0 : i32
    %c0_i32_0 = arith.constant 0 : i32
    return %arg0, %c0_i32 : i32, i32
  }
}

</mosaic_0001>

<llo_original>
// kernel: tpu_custom_call.1
$region0: #{tpu_custom_call.1}
  #allocation0 [shape = 'u32[]', space=smem, size = 0x4, offset = 0x4, fixed_abs, tag = 'smem constant byte address 0x4 - core index']
  #allocation1 [shape = 'u32[144,128]{1,0:T(1,128)}', space=vmem, size = 0x12000, scoped, tag = 'internal scratch']
  #allocation2 [shape = 'f32[2,32]{1,0:T(2,128)}', space=vmem, size = 0x400, scoped, tag = 'scratch operand']
  #allocation3 [shape = 'f32[1]{0:T(128)S(6)}', space=smem, size = 0x200, scoped, tag = 'scoped memory for tpu_custom_call.1']
  %s0 = inlined_call_operand.vmem [shape: f32[2,256,32], index: 0, kind: input, shape index: {}]
  %s1 = inlined_call_operand.vmem [shape: f32[2,256], index: 1, kind: input, shape index: {}]
  %s2 = inlined_call_operand.vmem [shape: f32[2,1], index: 2, kind: input, shape index: {}]
  %s3 = inlined_call_operand.vmem [shape: f32[32,32], index: 3, kind: input, shape index: {}]
  %s4 = inlined_call_operand.vmem [shape: f32[1,32], index: 4, kind: input, shape index: {}]
  %s5 = inlined_call_operand.vmem [shape: f32[1,32], index: 5, kind: input, shape index: {}]
  %s6 = inlined_call_operand.<no memory space> [shape: f32[1], index: 6, kind: input, shape index: {}]
  %s7 = inlined_call_operand.vmem [shape: f32[2,1], index: 7, kind: output, shape index: {}]
  %s8 = sld [smem:[#allocation0]]
  $region107: #{tpu_custom_call.1} parent=0
    _
  %s10 = ssub.s32 1, %s8
  %s11 = scalar_select 0, %s10, %s8
  %12 = sst [smem:[#allocation3]] %s6
  $region1: #{tpu_custom_call.1} parent=0
    #allocation4 [shape = 'u8[262144]{0}', space=vmem, size = 0x40000, scoped, tag = 'input window, operand 0']
    loop: start=0, step=1, limit=4
    $region2: #{tpu_custom_call.1} parent=1 // loop_pre_header
      _
    $region3: #{tpu_custom_call.1} parent=1 // loop_header
      %s14 = sphi 0, %s18
      %p15 = scmp.ge.s32.totalorder %s14, 4
      %s21 = sphi 0, %s33
      %s22 = sphi 0, %s29
      %s23 = sphi 0, %s21
      %s24 = sphi 0, %s22
      %s25 = sphi 0, %s23
      %s26 = sphi 0, %s24
      %s38 = sphi 0, %s40
      %s41 = sphi 0, %s38
      %s42 = sphi 0, %s41
      %s58 = sphi 0, %s42
      %s66 = sphi 0, %s68
      %s69 = sphi 0, %s66
      %s70 = sphi 0, %s69
      %s86 = sphi 0, %s70
      %s92 = sphi 0, %s94
      %s95 = sphi 0, %s92
      %s96 = sphi 0, %s95
      %s112 = sphi 0, %s96
      %s116 = sphi 0, %s116
      %s118 = sphi 0, %s116
      %s119 = sphi 0, %s118
      %s133 = sphi 0, %s119
      %s137 = sphi 0, %s137
      %s139 = sphi 0, %s137
      %s140 = sphi 0, %s139
      %s154 = sphi 0, %s140
      %s158 = sphi 0, %s158
      %s160 = sphi 0, %s158
      %s161 = sphi 0, %s160
      %s175 = sphi 0, %s161
      %s179 = sphi 0, %s179
      %s181 = sphi 0, %s179
      %s182 = sphi 0, %s181
      %s196 = sphi 0, %s182
      %s202 = sphi 0, %s204
      %s205 = sphi 0, %s202
      %s206 = sphi 0, %s205
      %s222 = sphi 0, %s206
    $region4: #{tpu_custom_call.1} parent=1 // loop_header_branch
      %17 = sbr.rel (%p15) target = $region8
    $region5: #{tpu_custom_call.1} parent=1 // loop_body
      %s19 = ssub.s32 %s14, 1
      %s20 = ssub.s32 %s14, 2
      %s27 = sadd.s32 1, %s22
      %p28 = scmp.ge.s32.totalorder %s27, 2
      %s29 = scalar_select %p28, 0, %s27
      %s30 = sadd.s32 1, %s21
      %s31 = scalar_select %p28, %s30, %s21
      %p32 = scmp.ge.s32.totalorder %s31, 1
      %s33 = scalar_select %p32, 0, %s31
      %s34 = ssub.s32 %s21, %s33
      %s35 = ssub.s32 %s22, %s29
      %s36 = sor.u32 %s34, %s35
      %p37 = scmp.eq.s32.totalorder %s36, 0
      %s39 = sadd.s32 %s38, 1
      %s40 = scalar_select %p37, %s38, %s39
      %p43 = pneg %p37
      %p44 = scmp.eq.s32.totalorder %s14, 1
      %p45 = por %p43, %p44
      %p46 = scmp.ne.s32.totalorder %s38, %s41
      %p47 = scmp.eq.s32.totalorder %s14, 0
      %p48 = por %p46, %p47
      %p49 = scmp.ne.s32.totalorder %s38, %s41
      %p50 = scmp.eq.s32.totalorder %s19, 1
      %p51 = por %p49, %p50
      %p52 = scmp.ne.s32.totalorder %s41, %s42
      %p53 = scmp.eq.s32.totalorder %s19, 0
      %p54 = por %p52, %p53
      %p55 = scmp.ne.s32.totalorder %s41, %s42
      %p56 = scmp.eq.s32.totalorder %s20, 1
      %p57 = por %p55, %p56
      %p59 = scmp.ne.s32.totalorder %s42, %s58
      %p60 = scmp.eq.s32.totalorder %s20, 0
      %p61 = por %p59, %p60
      %s62 = ssub.s32 %s21, %s33
      %s63 = ssub.s32 %s22, %s29
      %s64 = sor.u32 %s62, %s63
      %p65 = scmp.eq.s32.totalorder %s64, 0
      %s67 = sadd.s32 %s66, 1
      %s68 = scalar_select %p65, %s66, %s67
      %p71 = pneg %p65
      %p72 = scmp.eq.s32.totalorder %s14, 1
      %p73 = por %p71, %p72
      %p74 = scmp.ne.s32.totalorder %s66, %s69
      %p75 = scmp.eq.s32.totalorder %s14, 0
      %p76 = por %p74, %p75
      %p77 = scmp.ne.s32.totalorder %s66, %s69
      %p78 = scmp.eq.s32.totalorder %s19, 1
      %p79 = por %p77, %p78
      %p80 = scmp.ne.s32.totalorder %s69, %s70
      %p81 = scmp.eq.s32.totalorder %s19, 0
      %p82 = por %p80, %p81
      %p83 = scmp.ne.s32.totalorder %s69, %s70
      %p84 = scmp.eq.s32.totalorder %s20, 1
      %p85 = por %p83, %p84
      %p87 = scmp.ne.s32.totalorder %s70, %s86
      %p88 = scmp.eq.s32.totalorder %s20, 0
      %p89 = por %p87, %p88
      %s90 = ssub.s32 %s21, %s33
      %p91 = scmp.eq.s32.totalorder %s90, 0
      %s93 = sadd.s32 %s92, 1
      %s94 = scalar_select %p91, %s92, %s93
      %p97 = pneg %p91
      %p98 = scmp.eq.s32.totalorder %s14, 1
      %p99 = por %p97, %p98
      %p100 = scmp.ne.s32.totalorder %s92, %s95
      %p101 = scmp.eq.s32.totalorder %s14, 0
      %p102 = por %p100, %p101
      %p103 = scmp.ne.s32.totalorder %s92, %s95
      %p104 = scmp.eq.s32.totalorder %s19, 1
      %p105 = por %p103, %p104
      %p106 = scmp.ne.s32.totalorder %s95, %s96
      %p107 = scmp.eq.s32.totalorder %s19, 0
      %p108 = por %p106, %p107
      %p109 = scmp.ne.s32.totalorder %s95, %s96
      %p110 = scmp.eq.s32.totalorder %s20, 1
      %p111 = por %p109, %p110
      %p113 = scmp.ne.s32.totalorder %s96, %s112
      %p114 = scmp.eq.s32.totalorder %s20, 0
      %p115 = por %p113, %p114
      %s117 = sadd.s32 %s116, 1
      %p120 = scmp.eq.s32.totalorder %s14, 1
      %p121 = scmp.ne.s32.totalorder %s116, %s118
      %p122 = scmp.eq.s32.totalorder %s14, 0
      %p123 = por %p121, %p122
      %p124 = scmp.ne.s32.totalorder %s116, %s118
      %p125 = scmp.eq.s32.totalorder %s19, 1
      %p126 = por %p124, %p125
      %p127 = scmp.ne.s32.totalorder %s118, %s119
      %p128 = scmp.eq.s32.totalorder %s19, 0
      %p129 = por %p127, %p128
      %p130 = scmp.ne.s32.totalorder %s118, %s119
      %p131 = scmp.eq.s32.totalorder %s20, 1
      %p132 = por %p130, %p131
      %p134 = scmp.ne.s32.totalorder %s119, %s133
      %p135 = scmp.eq.s32.totalorder %s20, 0
      %p136 = por %p134, %p135
      %s138 = sadd.s32 %s137, 1
      %p141 = scmp.eq.s32.totalorder %s14, 1
      %p142 = scmp.ne.s32.totalorder %s137, %s139
      %p143 = scmp.eq.s32.totalorder %s14, 0
      %p144 = por %p142, %p143
      %p145 = scmp.ne.s32.totalorder %s137, %s139
      %p146 = scmp.eq.s32.totalorder %s19, 1
      %p147 = por %p145, %p146
      %p148 = scmp.ne.s32.totalorder %s139, %s140
      %p149 = scmp.eq.s32.totalorder %s19, 0
      %p150 = por %p148, %p149
      %p151 = scmp.ne.s32.totalorder %s139, %s140
      %p152 = scmp.eq.s32.totalorder %s20, 1
      %p153 = por %p151, %p152
      %p155 = scmp.ne.s32.totalorder %s140, %s154
      %p156 = scmp.eq.s32.totalorder %s20, 0
      %p157 = por %p155, %p156
      %s159 = sadd.s32 %s158, 1
      %p162 = scmp.eq.s32.totalorder %s14, 1
      %p163 = scmp.ne.s32.totalorder %s158, %s160
      %p164 = scmp.eq.s32.totalorder %s14, 0
      %p165 = por %p163, %p164
      %p166 = scmp.ne.s32.totalorder %s158, %s160
      %p167 = scmp.eq.s32.totalorder %s19, 1
      %p168 = por %p166, %p167
      %p169 = scmp.ne.s32.totalorder %s160, %s161
      %p170 = scmp.eq.s32.totalorder %s19, 0
      %p171 = por %p169, %p170
      %p172 = scmp.ne.s32.totalorder %s160, %s161
      %p173 = scmp.eq.s32.totalorder %s20, 1
      %p174 = por %p172, %p173
      %p176 = scmp.ne.s32.totalorder %s161, %s175
      %p177 = scmp.eq.s32.totalorder %s20, 0
      %p178 = por %p176, %p177
      %s180 = sadd.s32 %s179, 1
      %p183 = scmp.eq.s32.totalorder %s14, 1
      %p184 = scmp.ne.s32.totalorder %s179, %s181
      %p185 = scmp.eq.s32.totalorder %s14, 0
      %p186 = por %p184, %p185
      %p187 = scmp.ne.s32.totalorder %s179, %s181
      %p188 = scmp.eq.s32.totalorder %s19, 1
      %p189 = por %p187, %p188
      %p190 = scmp.ne.s32.totalorder %s181, %s182
      %p191 = scmp.eq.s32.totalorder %s19, 0
      %p192 = por %p190, %p191
      %p193 = scmp.ne.s32.totalorder %s181, %s182
      %p194 = scmp.eq.s32.totalorder %s20, 1
      %p195 = por %p193, %p194
      %p197 = scmp.ne.s32.totalorder %s182, %s196
      %p198 = scmp.eq.s32.totalorder %s20, 0
      %p199 = por %p197, %p198
      %s200 = ssub.s32 %s21, %s33
      %p201 = scmp.eq.s32.totalorder %s200, 0
      %s203 = sadd.s32 %s202, 1
      %s204 = scalar_select %p201, %s202, %s203
      %p207 = pneg %p201
      %p208 = scmp.eq.s32.totalorder %s14, 1
      %p209 = por %p207, %p208
      %p210 = scmp.ne.s32.totalorder %s202, %s205
      %p211 = scmp.eq.s32.totalorder %s14, 0
      %p212 = por %p210, %p211
      %p213 = scmp.ne.s32.totalorder %s202, %s205
      %p214 = scmp.eq.s32.totalorder %s19, 1
      %p215 = por %p213, %p214
      %p216 = scmp.ne.s32.totalorder %s205, %s206
      %p217 = scmp.eq.s32.totalorder %s19, 0
      %p218 = por %p216, %p217
      %p219 = scmp.ne.s32.totalorder %s205, %s206
      %p220 = scmp.eq.s32.totalorder %s20, 1
      %p221 = por %p219, %p220
      %p223 = scmp.ne.s32.totalorder %s206, %s222
      %p224 = scmp.eq.s32.totalorder %s20, 0
      %p225 = por %p223, %p224
      %p226 = scmp.le.s32.totalorder 1, %s14
      %p227 = scmp.lt.s32.totalorder %s14, 3
      %p228 = pnand %p226, %p227
      %p229 = pneg %p228
      // Predicated region
      $region9: #{tpu_custom_call.1} parent=5 // pred_check
        _
      $region10: #{tpu_custom_call.1} parent=5 // pred_check_branch
        %231 = sbr.rel (%p228) target = $region12
      $region11: #{tpu_custom_call.1} parent=5 // pred_region
        %s232 = ssub.s32 %s14, 1
        // Predicated region
        $region13: #{tpu_custom_call.1} parent=11 // pred_check
          %p233 = pneg %p108
        $region14: #{tpu_custom_call.1} parent=11 // pred_check_branch
          %235 = sbr.rel (%p233) target = $region16
        $region15: #{tpu_custom_call.1} parent=11 // pred_region
          %p236 = scmp.lt.s32.totalorder %s23, 0
          %s237 = scalar_select %p236, %s23, 0
          %s238 = smul.addr %s237, 2
          %s239 = scalar_lea.vmem %s2, %s238
        $region16: #{tpu_custom_call.1} parent=11 // pred_fallthru
          _
        // Predicated region
        $region17: #{tpu_custom_call.1} parent=11 // pred_check
          %p240 = pneg %p129
        $region18: #{tpu_custom_call.1} parent=11 // pred_check_branch
          %242 = sbr.rel (%p240) target = $region20
        $region19: #{tpu_custom_call.1} parent=11 // pred_region
          _
        $region20: #{tpu_custom_call.1} parent=11 // pred_fallthru
          _
        // Predicated region
        $region21: #{tpu_custom_call.1} parent=11 // pred_check
          %p243 = pneg %p150
        $region22: #{tpu_custom_call.1} parent=11 // pred_check_branch
          %245 = sbr.rel (%p243) target = $region24
        $region23: #{tpu_custom_call.1} parent=11 // pred_region
          _
        $region24: #{tpu_custom_call.1} parent=11 // pred_fallthru
          _
        // Predicated region
        $region25: #{tpu_custom_call.1} parent=11 // pred_check
          %p246 = pneg %p171
        $region26: #{tpu_custom_call.1} parent=11 // pred_check_branch
          %248 = sbr.rel (%p246) target = $region28
        $region27: #{tpu_custom_call.1} parent=11 // pred_region
          _
        $region28: #{tpu_custom_call.1} parent=11 // pred_fallthru
          _
        // Predicated region
        $region29: #{tpu_custom_call.1} parent=11 // pred_check
          %p249 = pneg %p192
        $region30: #{tpu_custom_call.1} parent=11 // pred_check_branch
          %251 = sbr.rel (%p249) target = $region32
        $region31: #{tpu_custom_call.1} parent=11 // pred_region
          _
        $region32: #{tpu_custom_call.1} parent=11 // pred_fallthru
          _
      $region12: #{tpu_custom_call.1} parent=5 // pred_fallthru
        _
      %p252 = scmp.lt.s32.totalorder %s14, 2
      // Predicated region
      $region33: #{tpu_custom_call.1} parent=5 // pred_check
        %p253 = pneg %p252
      $region34: #{tpu_custom_call.1} parent=5 // pred_check_branch
        %255 = sbr.rel (%p253) target = $region36
      $region35: #{tpu_custom_call.1} parent=5 // pred_region
        // Predicated region
        $region37: #{tpu_custom_call.1} parent=35 // pred_check
          %p256 = pneg %p48
        $region38: #{tpu_custom_call.1} parent=35 // pred_check_branch
          %258 = sbr.rel (%p256) target = $region40
        $region39: #{tpu_custom_call.1} parent=35 // pred_region
          %s259 = sand.u32 %s38, 1
          %s260 = sand.u32 %s38, 1
          %s261 = smul.addr %s260, 256
          %s262 = scalar_lea.vmem [#allocation4], %s261
          %s263 = smul.u32 2, %s21
          %s264 = smul.u32 16, %s22
          %s265 = smul.addr %s263, 32
          %s266 = sadd.s32 %s264, %s265
          %s267 = smul.addr %s266, 8
          %s268 = scalar_lea.vmem %s0, %s267
          // Predicated region
          $region41: #{tpu_custom_call.1} parent=39 // pred_check
            _
          $region42: #{tpu_custom_call.1} parent=39 // pred_check_branch
            %270 = sbr.rel (0) target = $region44
          $region43: #{tpu_custom_call.1} parent=39 // pred_region
            // Predicated region
            $region45: #{tpu_custom_call.1} parent=43 // pred_check
              _
            $region46: #{tpu_custom_call.1} parent=43 // pred_check_branch
              %272 = sbr.rel (0) target = $region48
            $region47: #{tpu_custom_call.1} parent=43 // pred_region
              // Predicated region
              $region60: #{tpu_custom_call.1} parent=47 // pred_check
                _
              $region61: #{tpu_custom_call.1} parent=47 // pred_check_branch
                %350 = sbr.rel (0) target = $region63
              $region62: #{tpu_custom_call.1} parent=47 // pred_region
                loop: start=0, step=1, limit=1
                $region64: #{tpu_custom_call.1} parent=62 // loop_pre_header
                  _
                $region65: #{tpu_custom_call.1} parent=62 // loop_header
                  %s352 = sphi 0, %s356
                  %p353 = scmp.ge.s32.totalorder %s352, 1
                  %s357 = sphi %s268, %s268
                  %s358 = sphi %s262, %s262
                $region66: #{tpu_custom_call.1} parent=62 // loop_header_branch
                  %355 = sbr.rel (%p353) target = $region70
                $region67: #{tpu_custom_call.1} parent=62 // loop_body
                  %v359 = vld [vmem:[%s357] sm:$0xff]
                  %360 = vst [vmem:[%s358] sm:$0xff] %v359
                  %v361 = vld [vmem:[%s357 + $0x8] sm:$0xff]
                  %362 = vst [vmem:[%s358 + $0x8] sm:$0xff] %v361
                  %v363 = vld [vmem:[%s357 + $0x10] sm:$0xff]
                  %364 = vst [vmem:[%s358 + $0x10] sm:$0xff] %v363
                  %v365 = vld [vmem:[%s357 + $0x18] sm:$0xff]
                  %366 = vst [vmem:[%s358 + $0x18] sm:$0xff] %v365
                  %v367 = vld [vmem:[%s357 + $0x20] sm:$0xff]
                  %368 = vst [vmem:[%s358 + $0x20] sm:$0xff] %v367
                  %v369 = vld [vmem:[%s357 + $0x28] sm:$0xff]
                  %370 = vst [vmem:[%s358 + $0x28] sm:$0xff] %v369
                  %v371 = vld [vmem:[%s357 + $0x30] sm:$0xff]
                  %372 = vst [vmem:[%s358 + $0x30] sm:$0xff] %v371
                  %v373 = vld [vmem:[%s357 + $0x38] sm:$0xff]
                  %374 = vst [vmem:[%s358 + $0x38] sm:$0xff] %v373
                  %v375 = vld [vmem:[%s357 + $0x40] sm:$0xff]
                  %376 = vst [vmem:[%s358 + $0x40] sm:$0xff] %v375
                  %v377 = vld [vmem:[%s357 + $0x48] sm:$0xff]
                  %378 = vst [vmem:[%s358 + $0x48] sm:$0xff] %v377
                  %v379 = vld [vmem:[%s357 + $0x50] sm:$0xff]
                  %380 = vst [vmem:[%s358 + $0x50] sm:$0xff] %v379
                  %v381 = vld [vmem:[%s357 + $0x58] sm:$0xff]
                  %382 = vst [vmem:[%s358 + $0x58] sm:$0xff] %v381
                  %v383 = vld [vmem:[%s357 + $0x60] sm:$0xff]
                  %384 = vst [vmem:[%s358 + $0x60] sm:$0xff] %v383
                  %v385 = vld [vmem:[%s357 + $0x68] sm:$0xff]
                  %386 = vst [vmem:[%s358 + $0x68] sm:$0xff] %v385
                  %v387 = vld [vmem:[%s357 + $0x70] sm:$0xff]
                  %388 = vst [vmem:[%s358 + $0x70] sm:$0xff] %v387
                  %v389 = vld [vmem:[%s357 + $0x78] sm:$0xff]
                  %390 = vst [vmem:[%s358 + $0x78] sm:$0xff] %v389
                  %v391 = vld [vmem:[%s357 + $0x100] sm:$0xff]
                  %392 = vst [vmem:[%s358 + $0x80] sm:$0xff] %v391
                  %v393 = vld [vmem:[%s357 + $0x108] sm:$0xff]
                  %394 = vst [vmem:[%s358 + $0x88] sm:$0xff] %v393
                  %v395 = vld [vmem:[%s357 + $0x110] sm:$0xff]
                  %396 = vst [vmem:[%s358 + $0x90] sm:$0xff] %v395
                  %v397 = vld [vmem:[%s357 + $0x118] sm:$0xff]
                  %398 = vst [vmem:[%s358 + $0x98] sm:$0xff] %v397
                  %v399 = vld [vmem:[%s357 + $0x120] sm:$0xff]
                  %400 = vst [vmem:[%s358 + $0xa0] sm:$0xff] %v399
                  %v401 = vld [vmem:[%s357 + $0x128] sm:$0xff]
                  %402 = vst [vmem:[%s358 + $0xa8] sm:$0xff] %v401
                  %v403 = vld [vmem:[%s357 + $0x130] sm:$0xff]
                  %404 = vst [vmem:[%s358 + $0xb0] sm:$0xff] %v403
                  %v405 = vld [vmem:[%s357 + $0x138] sm:$0xff]
                  %406 = vst [vmem:[%s358 + $0xb8] sm:$0xff] %v405
                  %v407 = vld [vmem:[%s357 + $0x140] sm:$0xff]
                  %408 = vst [vmem:[%s358 + $0xc0] sm:$0xff] %v407
                  %v409 = vld [vmem:[%s357 + $0x148] sm:$0xff]
                  %410 = vst [vmem:[%s358 + $0xc8] sm:$0xff] %v409
                  %v411 = vld [vmem:[%s357 + $0x150] sm:$0xff]
                  %412 = vst [vmem:[%s358 + $0xd0] sm:$0xff] %v411
                  %v413 = vld [vmem:[%s357 + $0x158] sm:$0xff]
                  %414 = vst [vmem:[%s358 + $0xd8] sm:$0xff] %v413
                  %v415 = vld [vmem:[%s357 + $0x160] sm:$0xff]
                  %416 = vst [vmem:[%s358 + $0xe0] sm:$0xff] %v415
                  %v417 = vld [vmem:[%s357 + $0x168] sm:$0xff]
                  %418 = vst [vmem:[%s358 + $0xe8] sm:$0xff] %v417
                  %v419 = vld [vmem:[%s357 + $0x170] sm:$0xff]
                  %420 = vst [vmem:[%s358 + $0xf0] sm:$0xff] %v419
                  %v421 = vld [vmem:[%s357 + $0x178] sm:$0xff]
                  %422 = vst [vmem:[%s358 + $0xf8] sm:$0xff] %v421
                $region68: #{tpu_custom_call.1} parent=62 // loop_footer
                  %s356 = sadd.s32 1, %s352
                $region69: #{tpu_custom_call.1} parent=62 // loop_footer_branch
                  %351 = sbr.rel target = $region65
                $region70: #{tpu_custom_call.1} parent=62 // loop_exit
                  _
              $region63: #{tpu_custom_call.1} parent=47 // pred_fallthru
                _
              // Predicated region
              $region71: #{tpu_custom_call.1} parent=47 // pred_check
                _
              $region72: #{tpu_custom_call.1} parent=47 // pred_check_branch
                %424 = sbr.rel target = $region74
              $region73: #{tpu_custom_call.1} parent=47 // pred_region
                _
              $region74: #{tpu_custom_call.1} parent=47 // pred_fallthru
                _
            $region48: #{tpu_custom_call.1} parent=43 // pred_fallthru
              _
            // Predicated region
            $region49: #{tpu_custom_call.1} parent=43 // pred_check
              _
            $region50: #{tpu_custom_call.1} parent=43 // pred_check_branch
              %274 = sbr.rel target = $region52
            $region51: #{tpu_custom_call.1} parent=43 // pred_region
              %s276 = ssub.s32 256, 1
              loop: start=0, step=1, limit=1
              $region53: #{tpu_custom_call.1} parent=51 // loop_pre_header
                _
              $region54: #{tpu_custom_call.1} parent=51 // loop_header
                %s278 = sphi 0, %s282
                %p279 = scmp.ge.s32.totalorder %s278, 1
                %s283 = sphi %s268, %s268
                %s284 = sphi %s262, %s262
              $region55: #{tpu_custom_call.1} parent=51 // loop_header_branch
                %281 = sbr.rel (%p279) target = $region59
              $region56: #{tpu_custom_call.1} parent=51 // loop_body
                %v285 = vld [vmem:[%s283] sm:%s276]
                %286 = vst [vmem:[%s284] sm:%s276] %v285
                %v287 = vld [vmem:[%s283 + $0x8] sm:%s276]
                %288 = vst [vmem:[%s284 + $0x8] sm:%s276] %v287
                %v289 = vld [vmem:[%s283 + $0x10] sm:%s276]
                %290 = vst [vmem:[%s284 + $0x10] sm:%s276] %v289
                %v291 = vld [vmem:[%s283 + $0x18] sm:%s276]
                %292 = vst [vmem:[%s284 + $0x18] sm:%s276] %v291
                %v293 = vld [vmem:[%s283 + $0x20] sm:%s276]
                %294 = vst [vmem:[%s284 + $0x20] sm:%s276] %v293
                %v295 = vld [vmem:[%s283 + $0x28] sm:%s276]
                %296 = vst [vmem:[%s284 + $0x28] sm:%s276] %v295
                %v297 = vld [vmem:[%s283 + $0x30] sm:%s276]
                %298 = vst [vmem:[%s284 + $0x30] sm:%s276] %v297
                %v299 = vld [vmem:[%s283 + $0x38] sm:%s276]
                %300 = vst [vmem:[%s284 + $0x38] sm:%s276] %v299
                %v301 = vld [vmem:[%s283 + $0x40] sm:%s276]
                %302 = vst [vmem:[%s284 + $0x40] sm:%s276] %v301
                %v303 = vld [vmem:[%s283 + $0x48] sm:%s276]
                %304 = vst [vmem:[%s284 + $0x48] sm:%s276] %v303
                %v305 = vld [vmem:[%s283 + $0x50] sm:%s276]
                %306 = vst [vmem:[%s284 + $0x50] sm:%s276] %v305
                %v307 = vld [vmem:[%s283 + $0x58] sm:%s276]
                %308 = vst [vmem:[%s284 + $0x58] sm:%s276] %v307
                %v309 = vld [vmem:[%s283 + $0x60] sm:%s276]
                %310 = vst [vmem:[%s284 + $0x60] sm:%s276] %v309
                %v311 = vld [vmem:[%s283 + $0x68] sm:%s276]
                %312 = vst [vmem:[%s284 + $0x68] sm:%s276] %v311
                %v313 = vld [vmem:[%s283 + $0x70] sm:%s276]
                %314 = vst [vmem:[%s284 + $0x70] sm:%s276] %v313
                %v315 = vld [vmem:[%s283 + $0x78] sm:%s276]
                %316 = vst [vmem:[%s284 + $0x78] sm:%s276] %v315
                %v317 = vld [vmem:[%s283 + $0x100] sm:%s276]
                %318 = vst [vmem:[%s284 + $0x80] sm:%s276] %v317
                %v319 = vld [vmem:[%s283 + $0x108] sm:%s276]
                %320 = vst [vmem:[%s284 + $0x88] sm:%s276] %v319
                %v321 = vld [vmem:[%s283 + $0x110] sm:%s276]
                %322 = vst [vmem:[%s284 + $0x90] sm:%s276] %v321
                %v323 = vld [vmem:[%s283 + $0x118] sm:%s276]
                %324 = vst [vmem:[%s284 + $0x98] sm:%s276] %v323
                %v325 = vld [vmem:[%s283 + $0x120] sm:%s276]
                %326 = vst [vmem:[%s284 + $0xa0] sm:%s276] %v325
                %v327 = vld [vmem:[%s283 + $0x128] sm:%s276]
                %328 = vst [vmem:[%s284 + $0xa8] sm:%s276] %v327
                %v329 = vld [vmem:[%s283 + $0x130] sm:%s276]
                %330 = vst [vmem:[%s284 + $0xb0] sm:%s276] %v329
                %v331 = vld [vmem:[%s283 + $0x138] sm:%s276]
                %332 = vst [vmem:[%s284 + $0xb8] sm:%s276] %v331
                %v333 = vld [vmem:[%s283 + $0x140] sm:%s276]
                %334 = vst [vmem:[%s284 + $0xc0] sm:%s276] %v333
                %v335 = vld [vmem:[%s283 + $0x148] sm:%s276]
                %336 = vst [vmem:[%s284 + $0xc8] sm:%s276] %v335
                %v337 = vld [vmem:[%s283 + $0x150] sm:%s276]
                %338 = vst [vmem:[%s284 + $0xd0] sm:%s276] %v337
                %v339 = vld [vmem:[%s283 + $0x158] sm:%s276]
                %340 = vst [vmem:[%s284 + $0xd8] sm:%s276] %v339
                %v341 = vld [vmem:[%s283 + $0x160] sm:%s276]
                %342 = vst [vmem:[%s284 + $0xe0] sm:%s276] %v341
                %v343 = vld [vmem:[%s283 + $0x168] sm:%s276]
                %344 = vst [vmem:[%s284 + $0xe8] sm:%s276] %v343
                %v345 = vld [vmem:[%s283 + $0x170] sm:%s276]
                %346 = vst [vmem:[%s284 + $0xf0] sm:%s276] %v345
                %v347 = vld [vmem:[%s283 + $0x178] sm:%s276]
                %348 = vst [vmem:[%s284 + $0xf8] sm:%s276] %v347
              $region57: #{tpu_custom_call.1} parent=51 // loop_footer
                %s282 = sadd.s32 1, %s278
              $region58: #{tpu_custom_call.1} parent=51 // loop_footer_branch
                %277 = sbr.rel target = $region54
              $region59: #{tpu_custom_call.1} parent=51 // loop_exit
                _
            $region52: #{tpu_custom_call.1} parent=43 // pred_fallthru
              _
          $region44: #{tpu_custom_call.1} parent=39 // pred_fallthru
            _
          %425 = vnop
        $region40: #{tpu_custom_call.1} parent=35 // pred_fallthru
          _
        // Predicated region
        $region75: #{tpu_custom_call.1} parent=35 // pred_check
          %p426 = pneg %p76
        $region76: #{tpu_custom_call.1} parent=35 // pred_check_branch
          %428 = sbr.rel (%p426) target = $region78
        $region77: #{tpu_custom_call.1} parent=35 // pred_region
          %p429 = scmp.lt.s32.totalorder %s21, 0
          %s430 = scalar_select %p429, %s21, 0
          %p431 = scmp.lt.s32.totalorder %s22, 1
          %s432 = scalar_select %p431, %s22, 1
          %s433 = smul.addr %s430, 2
          %s434 = sadd.s32 %s432, %s433
          %s435 = smul.addr %s434, 2
          %s436 = scalar_lea.vmem %s1, %s435
        $region78: #{tpu_custom_call.1} parent=35 // pred_fallthru
          _
      $region36: #{tpu_custom_call.1} parent=5 // pred_fallthru
        _
      %p437 = scmp.le.s32.totalorder 1, %s14
      %p438 = scmp.lt.s32.totalorder %s14, 3
      %p439 = pnand %p437, %p438
      %p440 = pneg %p439
      // Predicated region
      $region79: #{tpu_custom_call.1} parent=5 // pred_check
        _
      $region80: #{tpu_custom_call.1} parent=5 // pred_check_branch
        %442 = sbr.rel (%p439) target = $region82
      $region81: #{tpu_custom_call.1} parent=5 // pred_region
        %s443 = ssub.s32 %s14, 1
        %s444 = sand.u32 %s41, 1
        %s445 = sand.u32 %s41, 1
        %s446 = smul.addr %s445, 256
        %s447 = scalar_lea.vmem [#allocation4], %s446
        // Predicated region
        $region83: #{tpu_custom_call.1} parent=81 // pred_check
          %p448 = pneg %p54
        $region84: #{tpu_custom_call.1} parent=81 // pred_check_branch
          %450 = sbr.rel (%p448) target = $region86
        $region85: #{tpu_custom_call.1} parent=81 // pred_region
          _
        $region86: #{tpu_custom_call.1} parent=81 // pred_fallthru
          _
        %s451 = sand.u32 %s41, 1
        %s452 = sand.u32 %s41, 1
        %s453 = smul.addr %s452, 256
        %s454 = scalar_lea.vmem [#allocation4], %s453
        %p455 = pneg %p54
        %p456 = pneg %p51
        %p457 = scmp.lt.s32.totalorder %s23, 0
        %s458 = scalar_select %p457, %s23, 0
        %p459 = scmp.lt.s32.totalorder %s24, 1
        %s460 = scalar_select %p459, %s24, 1
        %s461 = smul.addr %s458, 2
        %s462 = sadd.s32 %s460, %s461
        %s463 = smul.addr %s462, 2
        %s464 = scalar_lea.vmem %s1, %s463
        %p465 = pneg %p82
        %p466 = pneg %p79
        %p467 = scmp.lt.s32.totalorder %s23, 0
        %s468 = scalar_select %p467, %s23, 0
        %s469 = smul.addr %s468, 2
        %s470 = scalar_lea.vmem %s2, %s469
        %p471 = pneg %p108
        %p472 = pneg %p105
        %p473 = pneg %p129
        %p474 = pneg %p126
        %p475 = pneg %p150
        %p476 = pneg %p147
        %p477 = pneg %p171
        %p478 = pneg %p168
        %p479 = pneg %p192
        %p480 = pneg %p189
        %p481 = pneg %p218
        %p482 = pneg %p215
        %p483 = scmp.lt.s32.totalorder %s23, 0
        %s484 = scalar_select %p483, %s23, 0
        %s485 = smul.addr %s484, 2
        %s486 = scalar_lea.vmem %s7, %s485
        %s487 = smul.u32 2, %s23
        %s488 = smul.u32 16, %s24
        %p489 = scmp.lt.s32.totalorder %s23, 0
        %s490 = scalar_select %p489, %s23, 0
        %p491 = scmp.lt.s32.totalorder %s24, 1
        %s492 = scalar_select %p491, %s24, 1
        %s493 = smul.addr %s490, 2
        %s494 = sadd.s32 %s492, %s493
        %s495 = smul.addr %s494, 2
        %s496 = scalar_lea.vmem %s1, %s495
        %p497 = scmp.lt.s32.totalorder %s23, 0
        %s498 = scalar_select %p497, %s23, 0
        %s499 = smul.addr %s498, 2
        %s500 = scalar_lea.vmem %s2, %s499
        %p501 = scmp.lt.s32.totalorder %s23, 0
        %s502 = scalar_select %p501, %s23, 0
        %s503 = smul.addr %s502, 2
        %s504 = scalar_lea.vmem %s7, %s503
        %p505 = scmp.eq.s32.totalorder %s24, 0
        // Predicated region
        $region87: #{tpu_custom_call.1} parent=81 // pred_check
          %p506 = pneg %p505
        $region88: #{tpu_custom_call.1} parent=81 // pred_check_branch
          %508 = sbr.rel (%p506) target = $region90
        $region89: #{tpu_custom_call.1} parent=81 // pred_region
          %vm509 = vcmask 254976
          %510 = vst.msk [vmem:[#allocation2] sm:$0x3] %vm509, 0.0
        $region90: #{tpu_custom_call.1} parent=81 // pred_fallthru
          _
        %v511 = vld [vmem:[%s447] sm:$0xff]
        %v512 = vld [vmem:[%s447 + $0x8] sm:$0xff]
        %v513 = vld [vmem:[%s447 + $0x10] sm:$0xff]
        %v514 = vld [vmem:[%s447 + $0x18] sm:$0xff]
        %v515 = vld [vmem:[%s447 + $0x20] sm:$0xff]
        %v516 = vld [vmem:[%s447 + $0x28] sm:$0xff]
        %v517 = vld [vmem:[%s447 + $0x30] sm:$0xff]
        %v518 = vld [vmem:[%s447 + $0x38] sm:$0xff]
        %v519 = vld [vmem:[%s447 + $0x40] sm:$0xff]
        %v520 = vld [vmem:[%s447 + $0x48] sm:$0xff]
        %v521 = vld [vmem:[%s447 + $0x50] sm:$0xff]
        %v522 = vld [vmem:[%s447 + $0x58] sm:$0xff]
        %v523 = vld [vmem:[%s447 + $0x60] sm:$0xff]
        %v524 = vld [vmem:[%s447 + $0x68] sm:$0xff]
        %v525 = vld [vmem:[%s447 + $0x70] sm:$0xff]
        %v526 = vld [vmem:[%s447 + $0x78] sm:$0xff]
        %v527 = vld [vmem:[%s447 + $0x80] sm:$0xff]
        %v528 = vld [vmem:[%s447 + $0x88] sm:$0xff]
        %v529 = vld [vmem:[%s447 + $0x90] sm:$0xff]
        %v530 = vld [vmem:[%s447 + $0x98] sm:$0xff]
        %v531 = vld [vmem:[%s447 + $0xa0] sm:$0xff]
        %v532 = vld [vmem:[%s447 + $0xa8] sm:$0xff]
        %v533 = vld [vmem:[%s447 + $0xb0] sm:$0xff]
        %v534 = vld [vmem:[%s447 + $0xb8] sm:$0xff]
        %v535 = vld [vmem:[%s447 + $0xc0] sm:$0xff]
        %v536 = vld [vmem:[%s447 + $0xc8] sm:$0xff]
        %v537 = vld [vmem:[%s447 + $0xd0] sm:$0xff]
        %v538 = vld [vmem:[%s447 + $0xd8] sm:$0xff]
        %v539 = vld [vmem:[%s447 + $0xe0] sm:$0xff]
        %v540 = vld [vmem:[%s447 + $0xe8] sm:$0xff]
        %v541 = vld [vmem:[%s447 + $0xf0] sm:$0xff]
        %v542 = vld [vmem:[%s447 + $0xf8] sm:$0xff]
        %v543 = vld [vmem:[%s496] sm:$0x3]
        %v544 = vld [vmem:[#allocation2] sm:$0x3]
        %v547 = vunpack.c.l.s4 1966171168
        %v548 = vunpack.c.0.s8 %v547
        %v549 = vlaneseq
        %v550 = vshrl.u32 %v549, 7
        %v551 = vsub.s32 %v548, %v550
        %v552 = vrot.slane %v543, %v551
        %v553 = vcombine.high %v552, %v552
        %v555 = vunpack.c.l.s4 1966171168
        %v556 = vunpack.c.0.s8 %v555
        %v557 = vlaneseq
        %v558 = vshrl.u32 %v557, 7
        %v559 = vsub.s32 %v556, %v558
        %v560 = vrot.slane %v552, %v559
        %v562 = vunpack.c.l.s4 1966171168
        %v563 = vunpack.c.0.s8 %v562
        %v564 = vlaneseq
        %v565 = vshrl.u32 %v564, 7
        %v566 = vsub.s32 %v563, %v565
        %v567 = vrot.slane %v553, %v566
        %570 = vmatprep.subr.mxu0 0.0
        %571 = vmatpush1.msra.mxu0 %v526
        %572 = vmatprep.subr.mxu0 0.0
        %573 = vmatpush1.msra.mxu0 %v525
        %574 = vmatprep.subr.mxu0 0.0
        %575 = vmatpush1.msra.mxu0 %v524
        %576 = vmatprep.subr.mxu0 0.0
        %577 = vmatpush1.msra.mxu0 %v523
        %578 = vmatprep.subr.mxu0 0.0
        %579 = vmatpush1.msra.mxu0 %v522
        %580 = vmatprep.subr.mxu0 0.0
        %581 = vmatpush1.msra.mxu0 %v521
        %582 = vmatprep.subr.mxu0 0.0
        %583 = vmatpush1.msra.mxu0 %v520
        %584 = vmatprep.subr.mxu0 0.0
        %585 = vmatpush1.msra.mxu0 %v519
        %586 = vmatprep.subr.mxu0 0.0
        %587 = vmatpush1.msra.mxu0 %v518
        %588 = vmatprep.subr.mxu0 0.0
        %589 = vmatpush1.msra.mxu0 %v517
        %590 = vmatprep.subr.mxu0 0.0
        %591 = vmatpush1.msra.mxu0 %v516
        %592 = vmatprep.subr.mxu0 0.0
        %593 = vmatpush1.msra.mxu0 %v515
        %594 = vmatprep.subr.mxu0 0.0
        %595 = vmatpush1.msra.mxu0 %v514
        %596 = vmatprep.subr.mxu0 0.0
        %597 = vmatpush1.msra.mxu0 %v513
        %598 = vmatprep.subr.mxu0 0.0
        %599 = vmatpush1.msra.mxu0 %v512
        %600 = vmatprep.subr.mxu0 0.0
        %601 = vmatpush1.msra.mxu0 %v511
        %602 = vmatprep.subr.mxu0 0.0
        %603 = vmatpush2.msra.mxu0 0.0
        %604 = vmatprep.subr.mxu0 0.0
        %605 = vmatpush2.msra.mxu0 0.0
        %606 = vmatprep.subr.mxu0 0.0
        %607 = vmatpush2.msra.mxu0 0.0
        %608 = vmatprep.subr.mxu0 0.0
        %609 = vmatpush2.msra.mxu0 0.0
        %610 = vmatprep.subr.mxu0 0.0
        %611 = vmatpush2.msra.mxu0 0.0
        %612 = vmatprep.subr.mxu0 0.0
        %613 = vmatpush2.msra.mxu0 0.0
        %614 = vmatprep.subr.mxu0 0.0
        %615 = vmatpush2.msra.mxu0 0.0
        %616 = vmatprep.subr.mxu0 0.0
        %617 = vmatpush2.msra.mxu0 0.0
        %618 = vmatprep.subr.mxu0 0.0
        %619 = vmatpush2.msra.mxu0 0.0
        %620 = vmatprep.subr.mxu0 0.0
        %621 = vmatpush2.msra.mxu0 0.0
        %622 = vmatprep.subr.mxu0 0.0
        %623 = vmatpush2.msra.mxu0 0.0
        %624 = vmatprep.subr.mxu0 0.0
        %625 = vmatpush2.msra.mxu0 0.0
        %626 = vmatprep.subr.mxu0 0.0
        %627 = vmatpush2.msra.mxu0 0.0
        %628 = vmatprep.subr.mxu0 0.0
        %629 = vmatpush2.msra.mxu0 0.0
        %630 = vmatprep.subr.mxu0 0.0
        %631 = vmatpush2.msra.mxu0 0.0
        %632 = vmatprep.subr.mxu0 0.0
        %633 = vmatpush2.msra.mxu0 0.0
        %634 = vmatprep.mubr.f32.mxu0 0.0
        %635 = vmatmul.mubr.f32.gmra.mxu0 %v560
        %v636 = vpop.f32.mrf.mxu0
        %v637 = vadd.f32 0.0, %v636
        %v638 = vpop.f32.mrf.mxu0
        %639 = vdwg.mxu0
        %640 = vmatprep.subr.mxu0 0.0
        %641 = vmatpush1.msra.mxu0 %v542
        %642 = vmatprep.subr.mxu0 0.0
        %643 = vmatpush1.msra.mxu0 %v541
        %644 = vmatprep.subr.mxu0 0.0
        %645 = vmatpush1.msra.mxu0 %v540
        %646 = vmatprep.subr.mxu0 0.0
        %647 = vmatpush1.msra.mxu0 %v539
        %648 = vmatprep.subr.mxu0 0.0
        %649 = vmatpush1.msra.mxu0 %v538
        %650 = vmatprep.subr.mxu0 0.0
        %651 = vmatpush1.msra.mxu0 %v537
        %652 = vmatprep.subr.mxu0 0.0
        %653 = vmatpush1.msra.mxu0 %v536
        %654 = vmatprep.subr.mxu0 0.0
        %655 = vmatpush1.msra.mxu0 %v535
        %656 = vmatprep.subr.mxu0 0.0
        %657 = vmatpush1.msra.mxu0 %v534
        %658 = vmatprep.subr.mxu0 0.0
        %659 = vmatpush1.msra.mxu0 %v533
        %660 = vmatprep.subr.mxu0 0.0
        %661 = vmatpush1.msra.mxu0 %v532
        %662 = vmatprep.subr.mxu0 0.0
        %663 = vmatpush1.msra.mxu0 %v531
        %664 = vmatprep.subr.mxu0 0.0
        %665 = vmatpush1.msra.mxu0 %v530
        %666 = vmatprep.subr.mxu0 0.0
        %667 = vmatpush1.msra.mxu0 %v529
        %668 = vmatprep.subr.mxu0 0.0
        %669 = vmatpush1.msra.mxu0 %v528
        %670 = vmatprep.subr.mxu0 0.0
        %671 = vmatpush1.msra.mxu0 %v527
        %672 = vmatprep.subr.mxu0 0.0
        %673 = vmatpush2.msra.mxu0 0.0
        %674 = vmatprep.subr.mxu0 0.0
        %675 = vmatpush2.msra.mxu0 0.0
        %676 = vmatprep.subr.mxu0 0.0
        %677 = vmatpush2.msra.mxu0 0.0
        %678 = vmatprep.subr.mxu0 0.0
        %679 = vmatpush2.msra.mxu0 0.0
        %680 = vmatprep.subr.mxu0 0.0
        %681 = vmatpush2.msra.mxu0 0.0
        %682 = vmatprep.subr.mxu0 0.0
        %683 = vmatpush2.msra.mxu0 0.0
        %684 = vmatprep.subr.mxu0 0.0
        %685 = vmatpush2.msra.mxu0 0.0
        %686 = vmatprep.subr.mxu0 0.0
        %687 = vmatpush2.msra.mxu0 0.0
        %688 = vmatprep.subr.mxu0 0.0
        %689 = vmatpush2.msra.mxu0 0.0
        %690 = vmatprep.subr.mxu0 0.0
        %691 = vmatpush2.msra.mxu0 0.0
        %692 = vmatprep.subr.mxu0 0.0
        %693 = vmatpush2.msra.mxu0 0.0
        %694 = vmatprep.subr.mxu0 0.0
        %695 = vmatpush2.msra.mxu0 0.0
        %696 = vmatprep.subr.mxu0 0.0
        %697 = vmatpush2.msra.mxu0 0.0
        %698 = vmatprep.subr.mxu0 0.0
        %699 = vmatpush2.msra.mxu0 0.0
        %700 = vmatprep.subr.mxu0 0.0
        %701 = vmatpush2.msra.mxu0 0.0
        %702 = vmatprep.subr.mxu0 0.0
        %703 = vmatpush2.msra.mxu0 0.0
        %704 = vmatprep.mubr.f32.mxu0 0.0
        %705 = vmatmul.mubr.f32.gmra.mxu0 %v567
        %v706 = vpop.f32.mrf.mxu0
        %v707 = vadd.f32 0.0, %v706
        %v708 = vpop.f32.mrf.mxu0
        %709 = vdwg.mxu0
        %v712 = vrot.slane %v707, 7
        %vm713 = vcmask 1041409
        %v714 = vsel %vm713, %v712, %v637
        %v716 = vadd.f32 %v544, %v714
        %vm717 = vcmask 254976
        %718 = vst.msk [vmem:[#allocation2] sm:$0x3] %vm717, %v716
        %p719 = scmp.eq.s32.totalorder %s24, 1
        // Predicated region
        $region91: #{tpu_custom_call.1} parent=81 // pred_check
          %p720 = pneg %p719
        $region92: #{tpu_custom_call.1} parent=81 // pred_check_branch
          %722 = sbr.rel (%p720) target = $region94
        $region93: #{tpu_custom_call.1} parent=81 // pred_region
          %v723 = vld [vmem:[%s500] sm:$0x3]
          %v724 = vmax.f32 %v723, 1e-06
          %v725 = vld [vmem:[#allocation2] sm:$0x3]
          %v726 = vrcp.pop %v724
          %728 = vset.pattern.permute.xlu0 0
          %729 = vperm.xlu0 %728, %v726
          %v730 = vpop.permute.xlu0 %729
          %v732 = vmul.f32 %v725, %v730
          %v733 = vld [vmem:[%s3] sm:$0xff]
          %v734 = vld [vmem:[%s3 + $0x8] sm:$0xff]
          %v735 = vld [vmem:[%s3 + $0x10] sm:$0xff]
          %v736 = vld [vmem:[%s3 + $0x18] sm:$0xff]
          %v737 = vld [vmem:[%s4] sm:$0x1]
          %v739 = vlaneseq
          %v740 = vshrl.u32 %v739, 7
          %v741 = vsub.s32 0, %v740
          %v742 = vrot.slane %v737, %v741
          %vm744 = vcmask 261120
          %v746 = vsel %vm744, %v732, 0
          %748 = vmatprep.subr.mxu0 0.0
          %749 = vmatpush1.msra.mxu0 0.0
          %750 = vmatprep.subr.mxu0 0.0
          %751 = vmatpush1.msra.mxu0 0.0
          %752 = vmatprep.subr.mxu0 0.0
          %753 = vmatpush1.msra.mxu0 0.0
          %754 = vmatprep.subr.mxu0 0.0
          %755 = vmatpush1.msra.mxu0 0.0
          %756 = vmatprep.subr.mxu0 0.0
          %757 = vmatpush1.msra.mxu0 0.0
          %758 = vmatprep.subr.mxu0 0.0
          %759 = vmatpush1.msra.mxu0 0.0
          %760 = vmatprep.subr.mxu0 0.0
          %761 = vmatpush1.msra.mxu0 0.0
          %762 = vmatprep.subr.mxu0 0.0
          %763 = vmatpush1.msra.mxu0 0.0
          %764 = vmatprep.subr.mxu0 0.0
          %765 = vmatpush1.msra.mxu0 0.0
          %766 = vmatprep.subr.mxu0 0.0
          %767 = vmatpush1.msra.mxu0 0.0
          %768 = vmatprep.subr.mxu0 0.0
          %769 = vmatpush1.msra.mxu0 0.0
          %770 = vmatprep.subr.mxu0 0.0
          %771 = vmatpush1.msra.mxu0 0.0
          %772 = vmatprep.subr.mxu0 0.0
          %773 = vmatpush1.msra.mxu0 %v736
          %774 = vmatprep.subr.mxu0 0.0
          %775 = vmatpush1.msra.mxu0 %v735
          %776 = vmatprep.subr.mxu0 0.0
          %777 = vmatpush1.msra.mxu0 %v734
          %778 = vmatprep.subr.mxu0 0.0
          %779 = vmatpush1.msra.mxu0 %v733
          %780 = vmatprep.subr.mxu0 0.0
          %781 = vmatpush2.msra.mxu0 0.0
          %782 = vmatprep.subr.mxu0 0.0
          %783 = vmatpush2.msra.mxu0 0.0
          %784 = vmatprep.subr.mxu0 0.0
          %785 = vmatpush2.msra.mxu0 0.0
          %786 = vmatprep.subr.mxu0 0.0
          %787 = vmatpush2.msra.mxu0 0.0
          %788 = vmatprep.subr.mxu0 0.0
          %789 = vmatpush2.msra.mxu0 0.0
          %790 = vmatprep.subr.mxu0 0.0
          %791 = vmatpush2.msra.mxu0 0.0
          %792 = vmatprep.subr.mxu0 0.0
          %793 = vmatpush2.msra.mxu0 0.0
          %794 = vmatprep.subr.mxu0 0.0
          %795 = vmatpush2.msra.mxu0 0.0
          %796 = vmatprep.subr.mxu0 0.0
          %797 = vmatpush2.msra.mxu0 0.0
          %798 = vmatprep.subr.mxu0 0.0
          %799 = vmatpush2.msra.mxu0 0.0
          %800 = vmatprep.subr.mxu0 0.0
          %801 = vmatpush2.msra.mxu0 0.0
          %802 = vmatprep.subr.mxu0 0.0
          %803 = vmatpush2.msra.mxu0 0.0
          %804 = vmatprep.subr.mxu0 0.0
          %805 = vmatpush2.msra.mxu0 0.0
          %806 = vmatprep.subr.mxu0 0.0
          %807 = vmatpush2.msra.mxu0 0.0
          %808 = vmatprep.subr.mxu0 0.0
          %809 = vmatpush2.msra.mxu0 0.0
          %810 = vmatprep.subr.mxu0 0.0
          %811 = vmatpush2.msra.mxu0 0.0
          %812 = vmatprep.mubr.f32.mxu0 0.0
          %813 = vmatmul.mubr.f32.gmra.mxu0 %v746
          %v814 = vpop.f32.mrf.mxu0
          %v815 = vadd.f32 %v742, %v814
          %v816 = vpop.f32.mrf.mxu0
          %817 = vdwg.mxu0
          %v818 = vtanh.pop %v815
          %v819 = vld [vmem:[%s5] sm:$0x1]
          %v821 = vlaneseq
          %v822 = vshrl.u32 %v821, 7
          %v823 = vsub.s32 0, %v822
          %v824 = vrot.slane %v819, %v823
          %v826 = vmul.f32 %v818, %v824
          %v827 = vsel %vm717, %v826, 0.0
          %828 = vadd.xlane.f32.xlu0 %v827
          %v829 = vpop.xlane.xlu0 %828
          %s830 = sld [smem:[#allocation3]]
          %v831 = vstv %s830
          %v832 = vadd.f32 %v829, %v831
          %vm833 = vcmask 1024
          %834 = vst.msk [vmem:[%s504] sm:$0x3] %vm833, %v832
        $region94: #{tpu_custom_call.1} parent=81 // pred_fallthru
          _
        %p835 = scmp.lt.s32.totalorder %s23, 0
        %s836 = scalar_select %p835, %s23, 0
        %s837 = smul.addr %s836, 2
        %s838 = scalar_lea.vmem %s7, %s837
        // Predicated region
        $region95: #{tpu_custom_call.1} parent=81 // pred_check
          %p839 = pneg %p215
        $region96: #{tpu_custom_call.1} parent=81 // pred_check_branch
          %841 = sbr.rel (%p839) target = $region98
        $region97: #{tpu_custom_call.1} parent=81 // pred_region
          _
        $region98: #{tpu_custom_call.1} parent=81 // pred_fallthru
          _
        // Predicated region
        $region99: #{tpu_custom_call.1} parent=81 // pred_check
          %p842 = pneg %p215
        $region100: #{tpu_custom_call.1} parent=81 // pred_check_branch
          %844 = sbr.rel (%p842) target = $region102
        $region101: #{tpu_custom_call.1} parent=81 // pred_region
          %p845 = scmp.lt.s32.totalorder %s23, 0
          %s846 = scalar_select %p845, %s23, 0
          %s847 = smul.addr %s846, 2
          %s848 = scalar_lea.vmem %s7, %s847
        $region102: #{tpu_custom_call.1} parent=81 // pred_fallthru
          _
      $region82: #{tpu_custom_call.1} parent=5 // pred_fallthru
        _
      %p849 = scmp.le.s32.totalorder 2, %s14
      // Predicated region
      $region103: #{tpu_custom_call.1} parent=5 // pred_check
        %p850 = pneg %p849
      $region104: #{tpu_custom_call.1} parent=5 // pred_check_branch
        %852 = sbr.rel (%p850) target = $region106
      $region105: #{tpu_custom_call.1} parent=5 // pred_region
        %s853 = ssub.s32 %s14, 2
      $region106: #{tpu_custom_call.1} parent=5 // pred_fallthru
        _
    $region6: #{tpu_custom_call.1} parent=1 // loop_footer
      %s18 = sadd.s32 1, %s14
    $region7: #{tpu_custom_call.1} parent=1 // loop_footer_branch
      %13 = sbr.rel target = $region3
    $region8: #{tpu_custom_call.1} parent=1 // loop_exit
      _

</llo_original>
